<compile_context>
chip_gen: v7x
topology: tpu7x:2x2x1
jax: 0.10.0
libtpu: 0.0.40
codegen_flags: <defaults>
</compile_context>

<pallas_src>
import functools

import jax
import jax.numpy as jnp
from jax.experimental import pallas as pl
from jax.experimental.pallas import tpu as pltpu


def _linear_kernel(x_ref, w_ref, b_ref, o_ref):
    # x_ref: (TB, F) f32   w_ref: (F, Opad) bf16   b_ref: (1, Opad) f32
    # o_ref: (TB, Opad) f32
    x = x_ref[...].astype(w_ref.dtype)          # bf16 for the MXU (cheap VPU cast)
    acc = jnp.dot(x, w_ref[...], preferred_element_type=jnp.float32)
    o_ref[...] = (acc + b_ref[...]).astype(o_ref.dtype)


def prepare_classifier_params(w, b, param_dtype=jnp.bfloat16):
    """One-time (init) parameter prep: NOT on the per-call path.

    w: (n_output, n_feature) as in nn.Linear  ->  (n_feature, Opad) param_dtype
    b: (n_output,)                            ->  (1, Opad) float32
    Opad = n_output rounded up to a multiple of 128 (lane-dense stores).
    Padded columns are zero, so they contribute exactly 0 to the output.
    """
    n_output, n_feature = w.shape
    o_pad = ((n_output + 127) // 128) * 128
    w_t = (jnp.zeros((n_feature, o_pad), param_dtype)
           .at[:, :n_output].set(w.T.astype(param_dtype)))
    b_p = (jnp.zeros((1, o_pad), jnp.float32)
           .at[0, :n_output].set(b.astype(jnp.float32)))
    return w_t, b_p


def classifier_forward(x, w_t, b_p, n_output=None, block_b=512):
    """y = x @ W.T + b using pre-transposed / pre-padded params from
    `prepare_classifier_params`. If n_output is None the padded (B, Opad)
    output is returned (lets a fused consumer skip the slice)."""
    B, F = x.shape
    o_pad = w_t.shape[1]

    # Tile the batch; TB is a multiple of 8 (or the full B), so the
    # (8, 128) BlockSpec constraint is satisfied. w/b stay pinned to block 0.
    tb = B if B <= block_b else block_b
    grid = (pl.cdiv(B, tb),)

    bytes_accessed = (x.size * x.dtype.itemsize
                      + w_t.size * w_t.dtype.itemsize
                      + b_p.size * b_p.dtype.itemsize
                      + B * o_pad * 4)
    cost = pl.CostEstimate(flops=2 * B * F * o_pad,
                           transcendentals=0,
                           bytes_accessed=bytes_accessed)

    out = pl.pallas_call(
        _linear_kernel,
        out_shape=jax.ShapeDtypeStruct((B, o_pad), jnp.float32),
        grid_spec=pltpu.PrefetchScalarGridSpec(
            num_scalar_prefetch=0,
            grid=grid,
            in_specs=[
                pl.BlockSpec((tb, F), lambda i: (i, 0)),        # x: tiled over B
                pl.BlockSpec((F, o_pad), lambda i: (0, 0)),     # weight: resident
                pl.BlockSpec((1, o_pad), lambda i: (0, 0)),     # bias: resident
            ],
            out_specs=pl.BlockSpec((tb, o_pad), lambda i: (i, 0)),
        ),
        compiler_params=pltpu.CompilerParams(
            dimension_semantics=("parallel",)),
        cost_estimate=cost,
    )(x, w_t, b_p)

    if n_output is None:
        return out
    return out[:, :n_output]


if __name__ == "__main__":
    n_feature, n_output = 512, 250
    batch = 8

    key = jax.random.PRNGKey(0)
    kx, kw, kb = jax.random.split(key, 3)

    # Deterministic parameter init (mimics nn.Linear uniform(-1/sqrt(F), 1/sqrt(F)))
    bound = 1.0 / (n_feature ** 0.5)
    w = jax.random.uniform(kw, (n_output, n_feature), jnp.float32, -bound, bound)
    b = jax.random.uniform(kb, (n_output,), jnp.float32, -bound, bound)
    x = jax.random.normal(kx, (batch, n_feature), jnp.float32)

    # --- init time (done once, off the per-call path) ---
    w_t, b_p = prepare_classifier_params(w, b, param_dtype=jnp.bfloat16)

    # --- per-call path: just the pallas_call (+ optional slice) ---
    fwd = jax.jit(functools.partial(classifier_forward, n_output=n_output))
    y = fwd(x, w_t, b_p)
    jax.block_until_ready(y)

    # correctness check vs plain JAX reference at matching (bf16) precision
    x16 = x.astype(jnp.bfloat16).astype(jnp.float32)
    w16 = w.astype(jnp.bfloat16).astype(jnp.float32)
    y_ref = x16 @ w16.T + b
    assert y.shape == (batch, n_output)
    assert jnp.allclose(y, y_ref, atol=2e-2, rtol=2e-2)

    print("KERNEL_OK")
</pallas_src>

<mosaic_0001>
module attributes {stable_mosaic.version = 11 : i64} {
  func.func @_linear_kernel(%arg0: i32, %arg1: memref<8x512xf32, #tpu.memory_space<vmem>>, %arg2: memref<512x256xbf16, #tpu.memory_space<vmem>>, %arg3: memref<1x256xf32, #tpu.memory_space<vmem>>, %arg4: memref<8x256xf32, #tpu.memory_space<vmem>>) attributes {dimension_semantics = [#tpu.dimension_semantics<parallel>], iteration_bounds = array<i64: 1>, scalar_prefetch = 0 : i64, scratch_operands = 0 : i64, tpu.core_type = #tpu.core_type<tc>, window_params = [{transform_indices = @transform_0, window_bounds = array<i64: 8, 512>}, {pipeline_mode = #tpu.pipeline_mode<synchronous>, transform_indices = @transform_1, window_bounds = array<i64: 512, 256>}, {pipeline_mode = #tpu.pipeline_mode<synchronous>, transform_indices = @transform_2, window_bounds = array<i64: 1, 256>}, {transform_indices = @transform_3, window_bounds = array<i64: 8, 256>}]} {
    %c0 = arith.constant 0 : index
    %c0_0 = arith.constant 0 : index
    %0 = vector.load %arg1[%c0, %c0_0] : memref<8x512xf32, #tpu.memory_space<vmem>>, vector<8x512xf32>
    %1 = arith.truncf %0 : vector<8x512xf32> to vector<8x512xbf16>
    %c0_1 = arith.constant 0 : index
    %c0_2 = arith.constant 0 : index
    %2 = vector.load %arg2[%c0_1, %c0_2] : memref<512x256xbf16, #tpu.memory_space<vmem>>, vector<512x256xbf16>
    %cst = arith.constant dense<0.000000e+00> : vector<8x256xf32>
    %3 = tpu.matmul %1, %2, %cst {dimension_numbers = #tpu.dot_dimension_numbers<[1], [0], [0], [1], [0, 0, 1, 1], [], []>} : vector<8x512xbf16>, vector<512x256xbf16>, vector<8x256xf32> -> vector<8x256xf32>
    %c0_3 = arith.constant 0 : index
    %c0_4 = arith.constant 0 : index
    %4 = vector.load %arg3[%c0_3, %c0_4] : memref<1x256xf32, #tpu.memory_space<vmem>>, vector<1x256xf32>
    %5 = vector.broadcast %4 : vector<1x256xf32> to vector<8x256xf32>
    %6 = arith.addf %3, %5 : vector<8x256xf32>
    %c0_5 = arith.constant 0 : index
    %c0_6 = arith.constant 0 : index
    %7 = vector.load %arg4[%c0_5, %c0_6] : memref<8x256xf32, #tpu.memory_space<vmem>>, vector<8x256xf32>
    tpu.vector_store %arg4[%c0_5, %c0_6], %6 {strides = array<i32>} : memref<8x256xf32, #tpu.memory_space<vmem>>, vector<8x256xf32>,
    return
  }
  func.func @transform_0(%arg0: i32) -> (i32, i32) {
    %c0_i32 = arith.constant 0 : i32
    %c0_i32_0 = arith.constant 0 : i32
    return %arg0, %c0_i32 : i32, i32
  }
  func.func @transform_1(%arg0: i32) -> (i32, i32) {
    %c0_i32 = arith.constant 0 : i32
    %c0_i32_0 = arith.constant 0 : i32
    %c0_i32_1 = arith.constant 0 : i32
    return %c0_i32, %c0_i32_0 : i32, i32
  }
  func.func @transform_2(%arg0: i32) -> (i32, i32) {
    %c0_i32 = arith.constant 0 : i32
    %c0_i32_0 = arith.constant 0 : i32
    %c0_i32_1 = arith.constant 0 : i32
    return %c0_i32, %c0_i32_0 : i32, i32
  }
  func.func @transform_3(%arg0: i32) -> (i32, i32) {
    %c0_i32 = arith.constant 0 : i32
    %c0_i32_0 = arith.constant 0 : i32
    return %arg0, %c0_i32 : i32, i32
  }
}

</mosaic_0001>

<llo_original>
// kernel: classifier_forward.1
$region0: #{classifier_forward.1}
  #allocation0 [shape = 'u32[]', space=smem, size = 0x4, offset = 0x4, fixed_abs, tag = 'smem constant byte address 0x4 - core index']
  #allocation1 [shape = 'u32[144,128]{1,0:T(1,128)}', space=vmem, size = 0x12000, scoped, tag = 'internal scratch']
  %s0 = inlined_call_operand.hbm [shape: f32[8,512], index: 0, kind: input, shape index: {}]
  %s1 = inlined_call_operand.hbm [shape: bf16[512,256], index: 1, kind: input, shape index: {}]
  %s2 = inlined_call_operand.vmem [shape: f32[1,256], index: 2, kind: input, shape index: {}]
  %s3 = inlined_call_operand.hbm [shape: f32[8,256], index: 3, kind: output, shape index: {}]
  %s4 = sld [smem:[#allocation0]]
  $region30: #{classifier_forward.1} parent=0
    _
  %s6 = ssub.s32 1, %s4
  %s7 = scalar_select 0, %s6, %s4
  $region1: #{classifier_forward.1} parent=0
    #allocation2 [shape = 'u8[16384]{0}', space=vmem, size = 0x4000, scoped, tag = 'input window, operand 0, single buffered']
    #allocation3 [shape = 's32[1]{0}', space=sflag, size = 0x4, scoped, tag = 'scoped memory for classifier_forward.1']
    #allocation4 [shape = 's32[1]{0}', space=sflag, size = 0x4, scoped, tag = 'scoped memory for classifier_forward.1']
    #allocation5 [shape = 'u8[262144]{0}', space=vmem, size = 0x40000, scoped, tag = 'input window, operand 1, single buffered']
    #allocation6 [shape = 's32[1]{0}', space=sflag, size = 0x4, scoped, tag = 'scoped memory for classifier_forward.1']
    #allocation7 [shape = 'u8[8192]{0}', space=vmem, size = 0x2000, scoped, tag = 'output window, operand 0, single buffered']
    %8 = vsyncpa [#allocation3], 0
    %9 = vsyncpa [#allocation6], 0
    %10 = vsyncpa [#allocation4], 0
    // Predicated region
    $region2: #{classifier_forward.1} parent=1 // pred_check
      _
    $region3: #{classifier_forward.1} parent=1 // pred_check_branch
      %12 = sbr.rel (0) target = $region5
    $region4: #{classifier_forward.1} parent=1 // pred_region
      %s14 = ssub.s32 512, 512
      %15 = vsyncadd [#allocation3], %s14
      %s17 = sshll.u32 [#allocation2], 4
      %s18 = int_to_ptr.vmem [resolvable:$true] %s17
      %20 = dma.hbm_to_vmem [thread:$0]  %s0, 512, %s18, [#allocation3]
    $region5: #{classifier_forward.1} parent=1 // pred_fallthru
      _
    // Predicated region
    $region6: #{classifier_forward.1} parent=1 // pred_check
      _
    $region7: #{classifier_forward.1} parent=1 // pred_check_branch
      %22 = sbr.rel (0) target = $region9
    $region8: #{classifier_forward.1} parent=1 // pred_region
      %s24 = ssub.s32 8192, 8192
      %25 = vsyncadd [#allocation6], %s24
      %s26 = sshll.u32 [#allocation5], 4
      %s27 = int_to_ptr.vmem [resolvable:$true] %s26
      %32 = dma.hbm_to_vmem [thread:$0]  %s1, 8192, %s27, [#allocation6], 128, 128, 8
    $region9: #{classifier_forward.1} parent=1 // pred_fallthru
      _
    // Predicated region
    $region10: #{classifier_forward.1} parent=1 // pred_check
      _
    $region11: #{classifier_forward.1} parent=1 // pred_check_branch
      %34 = sbr.rel (0) target = $region13
    $region12: #{classifier_forward.1} parent=1 // pred_region
      _
    $region13: #{classifier_forward.1} parent=1 // pred_fallthru
      _
    // Predicated region
    $region14: #{classifier_forward.1} parent=1 // pred_check
      _
    $region15: #{classifier_forward.1} parent=1 // pred_check_branch
      %36 = sbr.rel (0) target = $region17
    $region16: #{classifier_forward.1} parent=1 // pred_region
      %37 = dma.done [#allocation3], 512
    $region17: #{classifier_forward.1} parent=1 // pred_fallthru
      _
    // Predicated region
    $region18: #{classifier_forward.1} parent=1 // pred_check
      _
    $region19: #{classifier_forward.1} parent=1 // pred_check_branch
      %39 = sbr.rel (0) target = $region21
    $region20: #{classifier_forward.1} parent=1 // pred_region
      %40 = dma.done [#allocation6], 8192
    $region21: #{classifier_forward.1} parent=1 // pred_fallthru
      _
    %v41 = vld [vmem:[#allocation2] sm:$0xff]
    %v42 = vld [vmem:[#allocation2 + $0x8] sm:$0xff]
    %v43 = vld [vmem:[#allocation2 + $0x10] sm:$0xff]
    %v44 = vld [vmem:[#allocation2 + $0x18] sm:$0xff]
    %v45 = vpack.c.bf16 %v41, %v41
    %v46 = vpack.c.bf16 %v42, %v42
    %v47 = vpack.c.bf16 %v43, %v43
    %v48 = vpack.c.bf16 %v44, %v44
    %v49 = vld [vmem:[#allocation5] sm:$0xff]
    %v50 = vld [vmem:[#allocation5 + $0x8] sm:$0xff]
    %v51 = vld [vmem:[#allocation5 + $0x10] sm:$0xff]
    %v52 = vld [vmem:[#allocation5 + $0x18] sm:$0xff]
    %v53 = vld [vmem:[#allocation5 + $0x20] sm:$0xff]
    %v54 = vld [vmem:[#allocation5 + $0x28] sm:$0xff]
    %v55 = vld [vmem:[#allocation5 + $0x30] sm:$0xff]
    %v56 = vld [vmem:[#allocation5 + $0x38] sm:$0xff]
    %v57 = vld [vmem:[#allocation5 + $0x40] sm:$0xff]
    %v58 = vld [vmem:[#allocation5 + $0x48] sm:$0xff]
    %v59 = vld [vmem:[#allocation5 + $0x50] sm:$0xff]
    %v60 = vld [vmem:[#allocation5 + $0x58] sm:$0xff]
    %v61 = vld [vmem:[#allocation5 + $0x60] sm:$0xff]
    %v62 = vld [vmem:[#allocation5 + $0x68] sm:$0xff]
    %v63 = vld [vmem:[#allocation5 + $0x70] sm:$0xff]
    %v64 = vld [vmem:[#allocation5 + $0x78] sm:$0xff]
    %v65 = vld [vmem:[#allocation5 + $0x80] sm:$0xff]
    %v66 = vld [vmem:[#allocation5 + $0x88] sm:$0xff]
    %v67 = vld [vmem:[#allocation5 + $0x90] sm:$0xff]
    %v68 = vld [vmem:[#allocation5 + $0x98] sm:$0xff]
    %v69 = vld [vmem:[#allocation5 + $0xa0] sm:$0xff]
    %v70 = vld [vmem:[#allocation5 + $0xa8] sm:$0xff]
    %v71 = vld [vmem:[#allocation5 + $0xb0] sm:$0xff]
    %v72 = vld [vmem:[#allocation5 + $0xb8] sm:$0xff]
    %v73 = vld [vmem:[#allocation5 + $0xc0] sm:$0xff]
    %v74 = vld [vmem:[#allocation5 + $0xc8] sm:$0xff]
    %v75 = vld [vmem:[#allocation5 + $0xd0] sm:$0xff]
    %v76 = vld [vmem:[#allocation5 + $0xd8] sm:$0xff]
    %v77 = vld [vmem:[#allocation5 + $0xe0] sm:$0xff]
    %v78 = vld [vmem:[#allocation5 + $0xe8] sm:$0xff]
    %v79 = vld [vmem:[#allocation5 + $0xf0] sm:$0xff]
    %v80 = vld [vmem:[#allocation5 + $0xf8] sm:$0xff]
    %v81 = vld [vmem:[#allocation5 + $0x100] sm:$0xff]
    %v82 = vld [vmem:[#allocation5 + $0x108] sm:$0xff]
    %v83 = vld [vmem:[#allocation5 + $0x110] sm:$0xff]
    %v84 = vld [vmem:[#allocation5 + $0x118] sm:$0xff]
    %v85 = vld [vmem:[#allocation5 + $0x120] sm:$0xff]
    %v86 = vld [vmem:[#allocation5 + $0x128] sm:$0xff]
    %v87 = vld [vmem:[#allocation5 + $0x130] sm:$0xff]
    %v88 = vld [vmem:[#allocation5 + $0x138] sm:$0xff]
    %v89 = vld [vmem:[#allocation5 + $0x140] sm:$0xff]
    %v90 = vld [vmem:[#allocation5 + $0x148] sm:$0xff]
    %v91 = vld [vmem:[#allocation5 + $0x150] sm:$0xff]
    %v92 = vld [vmem:[#allocation5 + $0x158] sm:$0xff]
    %v93 = vld [vmem:[#allocation5 + $0x160] sm:$0xff]
    %v94 = vld [vmem:[#allocation5 + $0x168] sm:$0xff]
    %v95 = vld [vmem:[#allocation5 + $0x170] sm:$0xff]
    %v96 = vld [vmem:[#allocation5 + $0x178] sm:$0xff]
    %v97 = vld [vmem:[#allocation5 + $0x180] sm:$0xff]
    %v98 = vld [vmem:[#allocation5 + $0x188] sm:$0xff]
    %v99 = vld [vmem:[#allocation5 + $0x190] sm:$0xff]
    %v100 = vld [vmem:[#allocation5 + $0x198] sm:$0xff]
    %v101 = vld [vmem:[#allocation5 + $0x1a0] sm:$0xff]
    %v102 = vld [vmem:[#allocation5 + $0x1a8] sm:$0xff]
    %v103 = vld [vmem:[#allocation5 + $0x1b0] sm:$0xff]
    %v104 = vld [vmem:[#allocation5 + $0x1b8] sm:$0xff]
    %v105 = vld [vmem:[#allocation5 + $0x1c0] sm:$0xff]
    %v106 = vld [vmem:[#allocation5 + $0x1c8] sm:$0xff]
    %v107 = vld [vmem:[#allocation5 + $0x1d0] sm:$0xff]
    %v108 = vld [vmem:[#allocation5 + $0x1d8] sm:$0xff]
    %v109 = vld [vmem:[#allocation5 + $0x1e0] sm:$0xff]
    %v110 = vld [vmem:[#allocation5 + $0x1e8] sm:$0xff]
    %v111 = vld [vmem:[#allocation5 + $0x1f0] sm:$0xff]
    %v112 = vld [vmem:[#allocation5 + $0x1f8] sm:$0xff]
    %v113 = vld [vmem:[%s2] sm:$0x3]
    %v115 = vlaneseq
    %v116 = vshrl.u32 %v115, 7
    %v117 = vsub.s32 0, %v116
    %v118 = vrot.slane %v113, %v117
    %v119 = vlaneseq
    %v120 = vshrl.u32 %v119, 7
    %v121 = vsub.s32 1, %v120
    %v122 = vrot.slane %v113, %v121
    %v189 = vunpack.c.l.b16 %v49
    %v190 = vunpack.c.h.b16 %v49
    %v191 = vunpack.c.l.b16 %v50
    %v192 = vunpack.c.h.b16 %v50
    %v193 = vunpack.c.l.b16 %v51
    %v194 = vunpack.c.h.b16 %v51
    %v195 = vunpack.c.l.b16 %v52
    %v196 = vunpack.c.h.b16 %v52
    %v197 = vunpack.c.l.b16 %v53
    %v198 = vunpack.c.h.b16 %v53
    %v199 = vunpack.c.l.b16 %v54
    %v200 = vunpack.c.h.b16 %v54
    %v201 = vunpack.c.l.b16 %v55
    %v202 = vunpack.c.h.b16 %v55
    %v203 = vunpack.c.l.b16 %v56
    %v204 = vunpack.c.h.b16 %v56
    %v205 = vunpack.c.l.b16 %v57
    %v206 = vunpack.c.h.b16 %v57
    %v207 = vunpack.c.l.b16 %v58
    %v208 = vunpack.c.h.b16 %v58
    %v209 = vunpack.c.l.b16 %v59
    %v210 = vunpack.c.h.b16 %v59
    %v211 = vunpack.c.l.b16 %v60
    %v212 = vunpack.c.h.b16 %v60
    %v213 = vunpack.c.l.b16 %v61
    %v214 = vunpack.c.h.b16 %v61
    %v215 = vunpack.c.l.b16 %v62
    %v216 = vunpack.c.h.b16 %v62
    %v217 = vunpack.c.l.b16 %v63
    %v218 = vunpack.c.h.b16 %v63
    %v219 = vunpack.c.l.b16 %v64
    %v220 = vunpack.c.h.b16 %v64
    %v221 = vunpack.c.l.b16 %v65
    %v222 = vunpack.c.h.b16 %v65
    %v223 = vunpack.c.l.b16 %v66
    %v224 = vunpack.c.h.b16 %v66
    %v225 = vunpack.c.l.b16 %v67
    %v226 = vunpack.c.h.b16 %v67
    %v227 = vunpack.c.l.b16 %v68
    %v228 = vunpack.c.h.b16 %v68
    %v229 = vunpack.c.l.b16 %v69
    %v230 = vunpack.c.h.b16 %v69
    %v231 = vunpack.c.l.b16 %v70
    %v232 = vunpack.c.h.b16 %v70
    %v233 = vunpack.c.l.b16 %v71
    %v234 = vunpack.c.h.b16 %v71
    %v235 = vunpack.c.l.b16 %v72
    %v236 = vunpack.c.h.b16 %v72
    %v237 = vunpack.c.l.b16 %v73
    %v238 = vunpack.c.h.b16 %v73
    %v239 = vunpack.c.l.b16 %v74
    %v240 = vunpack.c.h.b16 %v74
    %v241 = vunpack.c.l.b16 %v75
    %v242 = vunpack.c.h.b16 %v75
    %v243 = vunpack.c.l.b16 %v76
    %v244 = vunpack.c.h.b16 %v76
    %v245 = vunpack.c.l.b16 %v77
    %v246 = vunpack.c.h.b16 %v77
    %v247 = vunpack.c.l.b16 %v78
    %v248 = vunpack.c.h.b16 %v78
    %v249 = vunpack.c.l.b16 %v79
    %v250 = vunpack.c.h.b16 %v79
    %v251 = vunpack.c.l.b16 %v80
    %v252 = vunpack.c.h.b16 %v80
    %v253 = vunpack.c.l.b16 %v81
    %v254 = vunpack.c.h.b16 %v81
    %v255 = vunpack.c.l.b16 %v82
    %v256 = vunpack.c.h.b16 %v82
    %v257 = vunpack.c.l.b16 %v83
    %v258 = vunpack.c.h.b16 %v83
    %v259 = vunpack.c.l.b16 %v84
    %v260 = vunpack.c.h.b16 %v84
    %v261 = vunpack.c.l.b16 %v85
    %v262 = vunpack.c.h.b16 %v85
    %v263 = vunpack.c.l.b16 %v86
    %v264 = vunpack.c.h.b16 %v86
    %v265 = vunpack.c.l.b16 %v87
    %v266 = vunpack.c.h.b16 %v87
    %v267 = vunpack.c.l.b16 %v88
    %v268 = vunpack.c.h.b16 %v88
    %v269 = vunpack.c.l.b16 %v89
    %v270 = vunpack.c.h.b16 %v89
    %v271 = vunpack.c.l.b16 %v90
    %v272 = vunpack.c.h.b16 %v90
    %v273 = vunpack.c.l.b16 %v91
    %v274 = vunpack.c.h.b16 %v91
    %v275 = vunpack.c.l.b16 %v92
    %v276 = vunpack.c.h.b16 %v92
    %v277 = vunpack.c.l.b16 %v93
    %v278 = vunpack.c.h.b16 %v93
    %v279 = vunpack.c.l.b16 %v94
    %v280 = vunpack.c.h.b16 %v94
    %v281 = vunpack.c.l.b16 %v95
    %v282 = vunpack.c.h.b16 %v95
    %v283 = vunpack.c.l.b16 %v96
    %v284 = vunpack.c.h.b16 %v96
    %v285 = vunpack.c.l.b16 %v97
    %v286 = vunpack.c.h.b16 %v97
    %v287 = vunpack.c.l.b16 %v98
    %v288 = vunpack.c.h.b16 %v98
    %v289 = vunpack.c.l.b16 %v99
    %v290 = vunpack.c.h.b16 %v99
    %v291 = vunpack.c.l.b16 %v100
    %v292 = vunpack.c.h.b16 %v100
    %v293 = vunpack.c.l.b16 %v101
    %v294 = vunpack.c.h.b16 %v101
    %v295 = vunpack.c.l.b16 %v102
    %v296 = vunpack.c.h.b16 %v102
    %v297 = vunpack.c.l.b16 %v103
    %v298 = vunpack.c.h.b16 %v103
    %v299 = vunpack.c.l.b16 %v104
    %v300 = vunpack.c.h.b16 %v104
    %v301 = vunpack.c.l.b16 %v105
    %v302 = vunpack.c.h.b16 %v105
    %v303 = vunpack.c.l.b16 %v106
    %v304 = vunpack.c.h.b16 %v106
    %v305 = vunpack.c.l.b16 %v107
    %v306 = vunpack.c.h.b16 %v107
    %v307 = vunpack.c.l.b16 %v108
    %v308 = vunpack.c.h.b16 %v108
    %v309 = vunpack.c.l.b16 %v109
    %v310 = vunpack.c.h.b16 %v109
    %v311 = vunpack.c.l.b16 %v110
    %v312 = vunpack.c.h.b16 %v110
    %v313 = vunpack.c.l.b16 %v111
    %v314 = vunpack.c.h.b16 %v111
    %v315 = vunpack.c.l.b16 %v112
    %v316 = vunpack.c.h.b16 %v112
    %v317 = vpack.c.b16 %v191, %v189
    %v318 = vpack.c.b16 %v192, %v190
    %v319 = vpack.c.b16 %v195, %v193
    %v320 = vpack.c.b16 %v196, %v194
    %v321 = vpack.c.b16 %v199, %v197
    %v322 = vpack.c.b16 %v200, %v198
    %v323 = vpack.c.b16 %v203, %v201
    %v324 = vpack.c.b16 %v204, %v202
    %v325 = vpack.c.b16 %v207, %v205
    %v326 = vpack.c.b16 %v208, %v206
    %v327 = vpack.c.b16 %v211, %v209
    %v328 = vpack.c.b16 %v212, %v210
    %v329 = vpack.c.b16 %v215, %v213
    %v330 = vpack.c.b16 %v216, %v214
    %v331 = vpack.c.b16 %v219, %v217
    %v332 = vpack.c.b16 %v220, %v218
    %v333 = vpack.c.b16 %v223, %v221
    %v334 = vpack.c.b16 %v224, %v222
    %v335 = vpack.c.b16 %v227, %v225
    %v336 = vpack.c.b16 %v228, %v226
    %v337 = vpack.c.b16 %v231, %v229
    %v338 = vpack.c.b16 %v232, %v230
    %v339 = vpack.c.b16 %v235, %v233
    %v340 = vpack.c.b16 %v236, %v234
    %v341 = vpack.c.b16 %v239, %v237
    %v342 = vpack.c.b16 %v240, %v238
    %v343 = vpack.c.b16 %v243, %v241
    %v344 = vpack.c.b16 %v244, %v242
    %v345 = vpack.c.b16 %v247, %v245
    %v346 = vpack.c.b16 %v248, %v246
    %v347 = vpack.c.b16 %v251, %v249
    %v348 = vpack.c.b16 %v252, %v250
    %v349 = vpack.c.b16 %v255, %v253
    %v350 = vpack.c.b16 %v256, %v254
    %v351 = vpack.c.b16 %v259, %v257
    %v352 = vpack.c.b16 %v260, %v258
    %v353 = vpack.c.b16 %v263, %v261
    %v354 = vpack.c.b16 %v264, %v262
    %v355 = vpack.c.b16 %v267, %v265
    %v356 = vpack.c.b16 %v268, %v266
    %v357 = vpack.c.b16 %v271, %v269
    %v358 = vpack.c.b16 %v272, %v270
    %v359 = vpack.c.b16 %v275, %v273
    %v360 = vpack.c.b16 %v276, %v274
    %v361 = vpack.c.b16 %v279, %v277
    %v362 = vpack.c.b16 %v280, %v278
    %v363 = vpack.c.b16 %v283, %v281
    %v364 = vpack.c.b16 %v284, %v282
    %v365 = vpack.c.b16 %v287, %v285
    %v366 = vpack.c.b16 %v288, %v286
    %v367 = vpack.c.b16 %v291, %v289
    %v368 = vpack.c.b16 %v292, %v290
    %v369 = vpack.c.b16 %v295, %v293
    %v370 = vpack.c.b16 %v296, %v294
    %v371 = vpack.c.b16 %v299, %v297
    %v372 = vpack.c.b16 %v300, %v298
    %v373 = vpack.c.b16 %v303, %v301
    %v374 = vpack.c.b16 %v304, %v302
    %v375 = vpack.c.b16 %v307, %v305
    %v376 = vpack.c.b16 %v308, %v306
    %v377 = vpack.c.b16 %v311, %v309
    %v378 = vpack.c.b16 %v312, %v310
    %v379 = vpack.c.b16 %v315, %v313
    %v380 = vpack.c.b16 %v316, %v314
    %445 = vmatprep.subr.bf16.mxu0 %v318
    %446 = vmatpush1.bf16.msra.mxu0 %v317
    %447 = vmatprep.subr.bf16.mxu0 %v320
    %448 = vmatpush1.bf16.msra.mxu0 %v319
    %449 = vmatprep.subr.bf16.mxu0 %v322
    %450 = vmatpush1.bf16.msra.mxu0 %v321
    %451 = vmatprep.subr.bf16.mxu0 %v324
    %452 = vmatpush1.bf16.msra.mxu0 %v323
    %453 = vmatprep.subr.bf16.mxu0 %v326
    %454 = vmatpush1.bf16.msra.mxu0 %v325
    %455 = vmatprep.subr.bf16.mxu0 %v328
    %456 = vmatpush1.bf16.msra.mxu0 %v327
    %457 = vmatprep.subr.bf16.mxu0 %v330
    %458 = vmatpush1.bf16.msra.mxu0 %v329
    %459 = vmatprep.subr.bf16.mxu0 %v332
    %460 = vmatpush1.bf16.msra.mxu0 %v331
    %461 = vmatprep.subr.bf16.mxu0 %v334
    %462 = vmatpush1.bf16.msra.mxu0 %v333
    %463 = vmatprep.subr.bf16.mxu0 %v336
    %464 = vmatpush1.bf16.msra.mxu0 %v335
    %465 = vmatprep.subr.bf16.mxu0 %v338
    %466 = vmatpush1.bf16.msra.mxu0 %v337
    %467 = vmatprep.subr.bf16.mxu0 %v340
    %468 = vmatpush1.bf16.msra.mxu0 %v339
    %469 = vmatprep.subr.bf16.mxu0 %v342
    %470 = vmatpush1.bf16.msra.mxu0 %v341
    %471 = vmatprep.subr.bf16.mxu0 %v344
    %472 = vmatpush1.bf16.msra.mxu0 %v343
    %473 = vmatprep.subr.bf16.mxu0 %v346
    %474 = vmatpush1.bf16.msra.mxu0 %v345
    %475 = vmatprep.subr.bf16.mxu0 %v348
    %476 = vmatpush1.bf16.msra.mxu0 %v347
    %477 = vmatprep.mubr.bf16.mxu0 %v46
    %478 = vmatmul.mubr.bf16.gmra.mrb[0].mxu0 %v45
    %v479 = vpop.f32.mrb[0].mxu0
    %v480 = vadd.f32 %v118, %v479
    %v481 = vpop.f32.mrb[0].mxu0
    %v482 = vadd.f32 %v122, %v481
    %v483 = vpop.f32.mrb[0].mxu0
    %v484 = vpop.f32.mrb[0].mxu0
    %485 = vdwg.mxu0
    %486 = vmatprep.subr.bf16.mxu0 %v350
    %487 = vmatpush1.bf16.msra.mxu0 %v349
    %488 = vmatprep.subr.bf16.mxu0 %v352
    %489 = vmatpush1.bf16.msra.mxu0 %v351
    %490 = vmatprep.subr.bf16.mxu0 %v354
    %491 = vmatpush1.bf16.msra.mxu0 %v353
    %492 = vmatprep.subr.bf16.mxu0 %v356
    %493 = vmatpush1.bf16.msra.mxu0 %v355
    %494 = vmatprep.subr.bf16.mxu0 %v358
    %495 = vmatpush1.bf16.msra.mxu0 %v357
    %496 = vmatprep.subr.bf16.mxu0 %v360
    %497 = vmatpush1.bf16.msra.mxu0 %v359
    %498 = vmatprep.subr.bf16.mxu0 %v362
    %499 = vmatpush1.bf16.msra.mxu0 %v361
    %500 = vmatprep.subr.bf16.mxu0 %v364
    %501 = vmatpush1.bf16.msra.mxu0 %v363
    %502 = vmatprep.subr.bf16.mxu0 %v366
    %503 = vmatpush1.bf16.msra.mxu0 %v365
    %504 = vmatprep.subr.bf16.mxu0 %v368
    %505 = vmatpush1.bf16.msra.mxu0 %v367
    %506 = vmatprep.subr.bf16.mxu0 %v370
    %507 = vmatpush1.bf16.msra.mxu0 %v369
    %508 = vmatprep.subr.bf16.mxu0 %v372
    %509 = vmatpush1.bf16.msra.mxu0 %v371
    %510 = vmatprep.subr.bf16.mxu0 %v374
    %511 = vmatpush1.bf16.msra.mxu0 %v373
    %512 = vmatprep.subr.bf16.mxu0 %v376
    %513 = vmatpush1.bf16.msra.mxu0 %v375
    %514 = vmatprep.subr.bf16.mxu0 %v378
    %515 = vmatpush1.bf16.msra.mxu0 %v377
    %516 = vmatprep.subr.bf16.mxu0 %v380
    %517 = vmatpush1.bf16.msra.mxu0 %v379
    %518 = vmatprep.mubr.bf16.mxu0 %v48
    %519 = vmatmul.mubr.bf16.gmra.mrb[0].mxu0 %v47
    %v520 = vpop.f32.mrb[0].mxu0
    %v521 = vadd.f32 %v480, %v520
    %v522 = vpop.f32.mrb[0].mxu0
    %v523 = vadd.f32 %v482, %v522
    %v524 = vpop.f32.mrb[0].mxu0
    %v525 = vpop.f32.mrb[0].mxu0
    %526 = vdwg.mxu0
    %527 = vst [vmem:[#allocation7] sm:$0xff] %v521
    %528 = vst [vmem:[#allocation7 + $0x8] sm:$0xff] %v523
    // Predicated region
    $region22: #{classifier_forward.1} parent=1 // pred_check
      _
    $region23: #{classifier_forward.1} parent=1 // pred_check_branch
      %530 = sbr.rel (0) target = $region25
    $region24: #{classifier_forward.1} parent=1 // pred_region
      %s532 = ssub.s32 256, 256
      %533 = vsyncadd [#allocation4], %s532
      %s535 = sshll.u32 [#allocation7], 4
      %s536 = int_to_ptr.vmem [resolvable:$true] %s535
      %538 = dma.vmem_to_hbm [thread:$0]  %s536, 256, %s3, [#allocation4]
    $region25: #{classifier_forward.1} parent=1 // pred_fallthru
      _
    // Predicated region
    $region26: #{classifier_forward.1} parent=1 // pred_check
      _
    $region27: #{classifier_forward.1} parent=1 // pred_check_branch
      %540 = sbr.rel (0) target = $region29
    $region28: #{classifier_forward.1} parent=1 // pred_region
      %541 = dma.done [#allocation4], 256
    $region29: #{classifier_forward.1} parent=1 // pred_fallthru
      _
    %542 = vsyncpa [#allocation3], 1
    %543 = vsyncpa [#allocation6], 1
    %544 = vsyncpa [#allocation4], 1

</llo_original>
